<compile_context>
chip_gen: v6e
topology: v6e:2x2x1
jax: 0.10.0
libtpu: 0.0.40
codegen_flags: <defaults>
</compile_context>

<pallas_src>
import functools

import jax
import jax.numpy as jnp
from jax import lax
from jax.experimental import pallas as pl
from jax.experimental.pallas import tpu as pltpu


def _round_up(x, m):
    return (x + m - 1) // m * m


def _elu(v):
    # ELU(alpha=1): v if v > 0 else exp(v) - 1   (f32 elementwise)
    return jnp.where(v > 0, v, jnp.exp(v) - 1.0)


# --------------------------------------------------------------- pass 1 -----
def edge_mlp_kernel(e_ref, w1_ref, b1_ref, h1_ref):
    h = jnp.dot(e_ref[...], w1_ref[...],
                preferred_element_type=jnp.float32) + b1_ref[...]
    h1_ref[...] = _elu(h).astype(jnp.bfloat16)


# --------------------------------------------------------------- pass 2 -----
def scatter_mlp2_kernel(fold_count, count_col,
                        nt_ref, et_ref, fi_ref, la_ref, act_ref,
                        h1_ref, col_ref, x_ref, w2a_ref, w2b_ref, b2_ref,
                        out_ref, cnt_ref):
    t = pl.program_id(0)
    nt = nt_ref[t]                       # node-tile index of this step

    @pl.when(fi_ref[t] == 1)
    def _init():
        out_ref[...] = jnp.zeros_like(out_ref)
        if not fold_count:
            cnt_ref[...] = jnp.zeros_like(cnt_ref)

    @pl.when(act_ref[t] == 1)            # skip padded tail steps entirely
    def _accumulate():
        tn = out_ref.shape[0]
        te = h1_ref.shape[0]
        node_ids = lax.broadcasted_iota(jnp.int32, (tn, te), 0) + nt * tn
        # Padded / out-of-tile edges match no node -> zero one-hot column.
        onehot = (node_ids == col_ref[...]).astype(jnp.bfloat16)   # [TN, TE]
        out_ref[...] += jnp.dot(onehot, h1_ref[...],
                                preferred_element_type=jnp.float32)
        if not fold_count:
            cnt_ref[:, 0:1] += jnp.sum(onehot.astype(jnp.float32), axis=1,
                                       keepdims=True)

    @pl.when(la_ref[t] == 1)
    def _finalize():
        sums = out_ref[...]                                        # [TN, Gp]
        if fold_count:
            counts = sums[:, count_col:count_col + 1]              # exact ints
        else:
            counts = cnt_ref[:, 0:1]
        inv = pl.reciprocal(jnp.maximum(counts, 1.0), approx=True)  # EUP slot
        agg = (sums * inv).astype(jnp.bfloat16)
        h2 = (jnp.dot(x_ref[...], w2a_ref[...],
                      preferred_element_type=jnp.float32)
              + jnp.dot(agg, w2b_ref[...],
                        preferred_element_type=jnp.float32)
              + b2_ref[...])
        out_ref[...] = _elu(h2)


# --------------------------------------------------------------- wrapper ----
def city_gnn_forward(x, edge_index, edge_attr, params,
                     tile_nodes=256, tile_edges=2048):
    """x: [N, node_h] f32, edge_index: [2, E] int32, edge_attr: [E, edge_h] f32."""
    n_nodes, node_h = x.shape
    n_edges, edge_h = edge_attr.shape
    gnn_h = params["b2"].shape[-1]
    in1 = 2 * node_h + edge_h

    # Fold the count lane only when it is free (gnn_h not already 128-aligned).
    fold_count = (gnn_h % 128) != 0
    if fold_count:
        g_pad = _round_up(gnn_h + 1, 128)
        count_col = gnn_h
    else:
        g_pad = _round_up(gnn_h, 128)
        count_col = -1

    tn = min(tile_nodes, _round_up(n_nodes, 8))
    te = min(tile_edges, _round_up(max(n_edges, 1), 128))
    n_pad = _round_up(n_nodes, tn)
    e_pad = _round_up(max(n_edges, 1), te)
    n_tiles = n_pad // tn
    e_tiles = e_pad // te
    t_max = e_tiles + n_tiles        # static bound: schedule length < t_max

    row = edge_index[0].astype(jnp.int32)
    col = edge_index[1].astype(jnp.int32)

    # Sort edges by destination so every node tile's edges are contiguous.
    order = jnp.argsort(col)
    row_s, col_s = row[order], col[order]
    ea_s = edge_attr[order]

    # Data-dependent gather + concat stays in JAX glue; bf16 halves DMA + MXU.
    e_feat = jnp.concatenate([x[row_s], x[col_s], ea_s], axis=1)
    e_feat = jnp.pad(e_feat, ((0, e_pad - n_edges), (0, 0))).astype(jnp.bfloat16)
    col_p = jnp.pad(col_s, (0, e_pad - n_edges),
                    constant_values=-1).reshape(1, e_pad)
    x_p = jnp.pad(x, ((0, n_pad - n_nodes), (0, 0))).astype(jnp.bfloat16)

    def pad_lane(a):
        return jnp.pad(a, ((0, 0), (0, g_pad - a.shape[1])))

    w1_p = pad_lane(params["w1"]).astype(jnp.bfloat16)              # [in1, Gp]
    b1_p = pad_lane(params["b1"]).astype(jnp.float32)               # [1,   Gp]
    if fold_count:
        # w1's count column is zero and ELU(1.0) == 1.0, so every edge row of
        # h1 carries an exact 1.0 in the count lane -> counts fall out of the
        # same one-hot matmul with no per-step extra work.
        b1_p = b1_p.at[0, count_col].set(1.0)
    w2a_p = pad_lane(params["w2a"]).astype(jnp.bfloat16)             # [nh, Gp]
    w2b_p = jnp.pad(params["w2b"], ((0, g_pad - gnn_h),
                                    (0, g_pad - gnn_h))).astype(jnp.bfloat16)
    b2_p = pad_lane(params["b2"]).astype(jnp.float32)                # [1,  Gp]

    # ---- pass 1: edge MLP, once per edge ------------------------------------
    h1 = pl.pallas_call(
        edge_mlp_kernel,
        out_shape=jax.ShapeDtypeStruct((e_pad, g_pad), jnp.bfloat16),
        grid=(e_tiles,),
        in_specs=[
            pl.BlockSpec((te, in1), lambda j: (j, 0)),
            pl.BlockSpec((in1, g_pad), lambda j: (0, 0)),
            pl.BlockSpec((1, g_pad), lambda j: (0, 0)),
        ],
        out_specs=pl.BlockSpec((te, g_pad), lambda j: (j, 0)),
        compiler_params=pltpu.CompilerParams(
            dimension_semantics=("parallel",),
            vmem_limit_bytes=48 * 1024 * 1024),
    )(e_feat, w1_p, b1_p)

    # ---- build the sorted-edge schedule (traced, static length t_max) -------
    node_lo = jnp.arange(n_tiles, dtype=jnp.int32) * tn
    start_e = jnp.searchsorted(col_s, node_lo, side="left").astype(jnp.int32)
    end_e = jnp.searchsorted(col_s, node_lo + tn, side="left").astype(jnp.int32)
    first_t = jnp.minimum(start_e // te, e_tiles - 1).astype(jnp.int32)
    last_t = jnp.where(end_e > start_e, (end_e - 1) // te, first_t).astype(jnp.int32)
    n_steps = (last_t - first_t + 1).astype(jnp.int32)               # >= 1
    starts = jnp.concatenate([jnp.zeros((1,), jnp.int32),
                              jnp.cumsum(n_steps)[:-1].astype(jnp.int32)])

    t_idx = jnp.arange(t_max, dtype=jnp.int32)
    nt_arr = jnp.clip(jnp.searchsorted(starts, t_idx, side="right") - 1,
                      0, n_tiles - 1).astype(jnp.int32)
    within = t_idx - starts[nt_arr]
    n_here = n_steps[nt_arr]
    act_arr = (within < n_here).astype(jnp.int32)        # 0 on padded tail steps
    et_arr = (first_t[nt_arr] + jnp.minimum(within, n_here - 1)).astype(jnp.int32)
    fi_arr = (within == 0).astype(jnp.int32)
    la_arr = (within == n_here - 1).astype(jnp.int32)

    # ---- pass 2: sparse scatter-mean + node MLP2 -----------------------------
    grid_spec = pltpu.PrefetchScalarGridSpec(
        num_scalar_prefetch=5,
        grid=(t_max,),
        in_specs=[
            pl.BlockSpec((te, g_pad),
                         lambda t, nt, et, fi, la, act: (et[t], 0)),   # h1 tile
            pl.BlockSpec((1, te),
                         lambda t, nt, et, fi, la, act: (0, et[t])),   # col tile
            pl.BlockSpec((tn, node_h),
                         lambda t, nt, et, fi, la, act: (nt[t], 0)),   # x tile
            pl.BlockSpec((node_h, g_pad),
                         lambda t, nt, et, fi, la, act: (0, 0)),       # w2a
            pl.BlockSpec((g_pad, g_pad),
                         lambda t, nt, et, fi, la, act: (0, 0)),       # w2b
            pl.BlockSpec((1, g_pad),
                         lambda t, nt, et, fi, la, act: (0, 0)),       # b2
        ],
        out_specs=pl.BlockSpec((tn, g_pad),
                               lambda t, nt, et, fi, la, act: (nt[t], 0)),
        scratch_shapes=[pltpu.VMEM((tn, 128), jnp.float32)],  # counts (unfolded)
    )

    out_pad = pl.pallas_call(
        functools.partial(scatter_mlp2_kernel, fold_count, count_col),
        out_shape=jax.ShapeDtypeStruct((n_pad, g_pad), jnp.float32),
        grid_spec=grid_spec,
        compiler_params=pltpu.CompilerParams(
            dimension_semantics=("arbitrary",),
            vmem_limit_bytes=48 * 1024 * 1024),
    )(nt_arr, et_arr, fi_arr, la_arr, act_arr,
      h1, col_p, x_p, w2a_p, w2b_p, b2_p)

    return out_pad[:n_nodes, :gnn_h]


# ---------------------------------------------------------------- helpers ---
def make_params(key, node_h, edge_h, gnn_h):
    k1, k2, k3, k4 = jax.random.split(key, 4)
    in1 = 2 * node_h + edge_h
    in2 = node_h + gnn_h
    w1 = jax.random.normal(k1, (in1, gnn_h), jnp.float32) * 0.1
    b1 = jax.random.normal(k2, (1, gnn_h), jnp.float32) * 0.1
    w2 = jax.random.normal(k3, (in2, gnn_h), jnp.float32) * 0.1
    b2 = jax.random.normal(k4, (1, gnn_h), jnp.float32) * 0.1
    return {
        "w1": w1, "b1": b1,
        "w2a": w2[:node_h],       # multiplies x
        "w2b": w2[node_h:],       # multiplies the aggregated messages
        "b2": b2,
    }


def reference_forward(x, edge_index, edge_attr, params):
    """Pure-JAX f32 reference mirroring the PyTorch module."""
    row, col = edge_index[0], edge_index[1]
    n = x.shape[0]
    out = jnp.concatenate([x[row], x[col], edge_attr], axis=1)
    out = out @ params["w1"] + params["b1"]
    out = jnp.where(out > 0, out, jnp.exp(out) - 1.0)
    sums = jax.ops.segment_sum(out, col, num_segments=n)
    counts = jax.ops.segment_sum(jnp.ones((col.shape[0],), jnp.float32), col,
                                 num_segments=n)[:, None]
    mean = sums / jnp.maximum(counts, 1.0)
    cat = jnp.concatenate([x, mean], axis=1)
    w2 = jnp.concatenate([params["w2a"], params["w2b"]], axis=0)
    h2 = cat @ w2 + params["b2"]
    return jnp.where(h2 > 0, h2, jnp.exp(h2) - 1.0)


if __name__ == "__main__":
    node_h, edge_h, gnn_h = 4, 4, 32

    # --- small config (single node tile / single edge tile) -----------------
    n_nodes, n_edges = 8, 16
    kx, ke, ki, kp = jax.random.split(jax.random.PRNGKey(0), 4)
    x = jax.random.normal(kx, (n_nodes, node_h), jnp.float32)
    edge_attr = jax.random.normal(ke, (n_edges, edge_h), jnp.float32)
    edge_index = jax.random.randint(ki, (2, n_edges), 0, n_nodes, jnp.int32)
    params = make_params(kp, node_h, edge_h, gnn_h)

    out = jax.block_until_ready(
        city_gnn_forward(x, edge_index, edge_attr, params))
    ref = reference_forward(x, edge_index, edge_attr, params)
    assert out.shape == (n_nodes, gnn_h)
    # bf16 MXU inputs -> loosened tolerance vs the f32 reference.
    assert jnp.allclose(out, ref, atol=2e-2, rtol=2e-2), (
        float(jnp.max(jnp.abs(out - ref))))

    # --- larger config exercising the multi-tile sorted-edge schedule --------
    n_nodes2, n_edges2 = 300, 3000
    kx2, ke2, ki2, kp2 = jax.random.split(jax.random.PRNGKey(1), 4)
    x2 = jax.random.normal(kx2, (n_nodes2, node_h), jnp.float32)
    ea2 = jax.random.normal(ke2, (n_edges2, edge_h), jnp.float32)
    ei2 = jax.random.randint(ki2, (2, n_edges2), 0, n_nodes2, jnp.int32)
    p2 = make_params(kp2, node_h, edge_h, gnn_h)
    out2 = jax.block_until_ready(
        city_gnn_forward(x2, ei2, ea2, p2, tile_nodes=128, tile_edges=512))
    ref2 = reference_forward(x2, ei2, ea2, p2)
    assert jnp.allclose(out2, ref2, atol=3e-2, rtol=3e-2), (
        float(jnp.max(jnp.abs(out2 - ref2))))

    print("KERNEL_OK")
</pallas_src>

<mosaic_0001>
module attributes {stable_mosaic.version = 11 : i64} {
  func.func @edge_mlp_kernel(%arg0: i32, %arg1: memref<128x12xbf16, #tpu.memory_space<vmem>>, %arg2: memref<12x128xbf16, #tpu.memory_space<vmem>>, %arg3: memref<1x128xf32, #tpu.memory_space<vmem>>, %arg4: memref<128x128xbf16, #tpu.memory_space<vmem>>) attributes {dimension_semantics = [#tpu.dimension_semantics<parallel>], iteration_bounds = array<i64: 1>, scalar_prefetch = 0 : i64, scratch_operands = 0 : i64, tpu.core_type = #tpu.core_type<tc>, window_params = [{transform_indices = @transform_0, window_bounds = array<i64: 128, 12>}, {pipeline_mode = #tpu.pipeline_mode<synchronous>, transform_indices = @transform_1, window_bounds = array<i64: 12, 128>}, {pipeline_mode = #tpu.pipeline_mode<synchronous>, transform_indices = @transform_2, window_bounds = array<i64: 1, 128>}, {transform_indices = @transform_3, window_bounds = array<i64: 128, 128>}]} {
    %c0 = arith.constant 0 : index
    %c0_0 = arith.constant 0 : index
    %0 = vector.load %arg1[%c0, %c0_0] : memref<128x12xbf16, #tpu.memory_space<vmem>>, vector<128x12xbf16>
    %c0_1 = arith.constant 0 : index
    %c0_2 = arith.constant 0 : index
    %1 = vector.load %arg2[%c0_1, %c0_2] : memref<12x128xbf16, #tpu.memory_space<vmem>>, vector<12x128xbf16>
    %cst = arith.constant dense<0.000000e+00> : vector<128x128xf32>
    %2 = tpu.matmul %0, %1, %cst {dimension_numbers = #tpu.dot_dimension_numbers<[1], [0], [0], [1], [0, 0, 1, 1], [], []>} : vector<128x12xbf16>, vector<12x128xbf16>, vector<128x128xf32> -> vector<128x128xf32>
    %c0_3 = arith.constant 0 : index
    %c0_4 = arith.constant 0 : index
    %3 = vector.load %arg3[%c0_3, %c0_4] : memref<1x128xf32, #tpu.memory_space<vmem>>, vector<1x128xf32>
    %4 = vector.broadcast %3 : vector<1x128xf32> to vector<128x128xf32>
    %5 = arith.addf %2, %4 : vector<128x128xf32>
    %cst_5 = arith.constant 0.000000e+00 : f32
    %6 = vector.broadcast %cst_5 : f32 to vector<128x128xf32>
    %7 = arith.cmpf ogt, %5, %6 : vector<128x128xf32>
    %8 = math.exp %5 : vector<128x128xf32>
    %cst_6 = arith.constant 1.000000e+00 : f32
    %9 = vector.broadcast %cst_6 : f32 to vector<128x128xf32>
    %10 = arith.subf %8, %9 : vector<128x128xf32>
    %11 = arith.select %7, %5, %10 : vector<128x128xi1>, vector<128x128xf32>
    %12 = arith.truncf %11 : vector<128x128xf32> to vector<128x128xbf16>
    %c0_7 = arith.constant 0 : index
    %c0_8 = arith.constant 0 : index
    %13 = vector.load %arg4[%c0_7, %c0_8] : memref<128x128xbf16, #tpu.memory_space<vmem>>, vector<128x128xbf16>
    tpu.vector_store %arg4[%c0_7, %c0_8], %12 {strides = array<i32>} : memref<128x128xbf16, #tpu.memory_space<vmem>>, vector<128x128xbf16>,
    return
  }
  func.func @transform_0(%arg0: i32) -> (i32, i32) {
    %c0_i32 = arith.constant 0 : i32
    %c0_i32_0 = arith.constant 0 : i32
    return %arg0, %c0_i32 : i32, i32
  }
  func.func @transform_1(%arg0: i32) -> (i32, i32) {
    %c0_i32 = arith.constant 0 : i32
    %c0_i32_0 = arith.constant 0 : i32
    %c0_i32_1 = arith.constant 0 : i32
    return %c0_i32, %c0_i32_0 : i32, i32
  }
  func.func @transform_2(%arg0: i32) -> (i32, i32) {
    %c0_i32 = arith.constant 0 : i32
    %c0_i32_0 = arith.constant 0 : i32
    %c0_i32_1 = arith.constant 0 : i32
    return %c0_i32, %c0_i32_0 : i32, i32
  }
  func.func @transform_3(%arg0: i32) -> (i32, i32) {
    %c0_i32 = arith.constant 0 : i32
    %c0_i32_0 = arith.constant 0 : i32
    return %arg0, %c0_i32 : i32, i32
  }
}

</mosaic_0001>

<llo_original>
// kernel: tpu_custom_call.1
$region0: #{tpu_custom_call.1}
  #allocation0 [shape = 'u32[]', space=smem, size = 0x4, offset = 0x4, fixed_abs, tag = 'smem constant byte address 0x4 - core index']
  #allocation1 [shape = 'u32[144,128]{1,0:T(1,128)}', space=vmem, size = 0x12000, scoped, tag = 'internal scratch']
  %s0 = inlined_call_operand.vmem [shape: bf16[128,12], index: 0, kind: input, shape index: {}]
  %s1 = inlined_call_operand.vmem [shape: bf16[12,128], index: 1, kind: input, shape index: {}]
  %s2 = inlined_call_operand.vmem [shape: f32[1,128], index: 2, kind: input, shape index: {}]
  %s3 = inlined_call_operand.hbm [shape: bf16[128,128], index: 3, kind: output, shape index: {}]
  %s4 = sld [smem:[#allocation0]]
  $region22: #{tpu_custom_call.1} parent=0
    _
  %s6 = ssub.s32 1, %s4
  %s7 = scalar_select 0, %s6, %s4
  $region1: #{tpu_custom_call.1} parent=0
    #allocation2 [shape = 'u8[32768]{0}', space=vmem, size = 0x8000, scoped, tag = 'output window, operand 0, single buffered']
    #allocation3 [shape = 's32[1]{0}', space=sflag, size = 0x4, scoped, tag = 'scoped memory for tpu_custom_call.1']
    %8 = vsyncpa [#allocation3], 0
    // Predicated region
    $region2: #{tpu_custom_call.1} parent=1 // pred_check
      _
    $region3: #{tpu_custom_call.1} parent=1 // pred_check_branch
      %10 = sbr.rel (0) target = $region5
    $region4: #{tpu_custom_call.1} parent=1 // pred_region
      _
    $region5: #{tpu_custom_call.1} parent=1 // pred_fallthru
      _
    // Predicated region
    $region6: #{tpu_custom_call.1} parent=1 // pred_check
      _
    $region7: #{tpu_custom_call.1} parent=1 // pred_check_branch
      %12 = sbr.rel (0) target = $region9
    $region8: #{tpu_custom_call.1} parent=1 // pred_region
      _
    $region9: #{tpu_custom_call.1} parent=1 // pred_fallthru
      _
    // Predicated region
    $region10: #{tpu_custom_call.1} parent=1 // pred_check
      _
    $region11: #{tpu_custom_call.1} parent=1 // pred_check_branch
      %14 = sbr.rel (0) target = $region13
    $region12: #{tpu_custom_call.1} parent=1 // pred_region
      _
    $region13: #{tpu_custom_call.1} parent=1 // pred_fallthru
      _
    %v16 = vld [vmem:[%s0] sm:$0xf]
    %v17 = vld [vmem:[%s0 + $0x4] sm:$0xf]
    %v18 = vld [vmem:[%s0 + $0x8] sm:$0xf]
    %v19 = vld [vmem:[%s0 + $0xc] sm:$0xf]
    %v20 = vld [vmem:[%s0 + $0x10] sm:$0xf]
    %v21 = vld [vmem:[%s0 + $0x14] sm:$0xf]
    %v22 = vld [vmem:[%s0 + $0x18] sm:$0xf]
    %v23 = vld [vmem:[%s0 + $0x1c] sm:$0xf]
    %v24 = vld [vmem:[%s0 + $0x20] sm:$0xf]
    %v25 = vld [vmem:[%s0 + $0x24] sm:$0xf]
    %v26 = vld [vmem:[%s0 + $0x28] sm:$0xf]
    %v27 = vld [vmem:[%s0 + $0x2c] sm:$0xf]
    %v28 = vld [vmem:[%s0 + $0x30] sm:$0xf]
    %v29 = vld [vmem:[%s0 + $0x34] sm:$0xf]
    %v30 = vld [vmem:[%s0 + $0x38] sm:$0xf]
    %v31 = vld [vmem:[%s0 + $0x3c] sm:$0xf]
    %v32 = vld [vmem:[%s1] sm:$0xf]
    %v33 = vld [vmem:[%s1 + $0x4] sm:$0x3]
    %v34 = vld [vmem:[%s2] sm:$0x1]
    %v36 = vlaneseq
    %v37 = vshrl.u32 %v36, 7
    %v38 = vsub.s32 0, %v37
    %v39 = vrot.slane %v34, %v38
    %v57 = vunpack.c.l.b16 %v16
    %v58 = vunpack.c.l.b16 %v17
    %v59 = vunpack.c.l.b16 %v18
    %v60 = vunpack.c.l.b16 %v19
    %v61 = vunpack.c.l.b16 %v20
    %v62 = vunpack.c.l.b16 %v21
    %v63 = vunpack.c.l.b16 %v22
    %v64 = vunpack.c.l.b16 %v23
    %v65 = vunpack.c.l.b16 %v24
    %v66 = vunpack.c.l.b16 %v25
    %v67 = vunpack.c.l.b16 %v26
    %v68 = vunpack.c.l.b16 %v27
    %v69 = vunpack.c.l.b16 %v28
    %v70 = vunpack.c.l.b16 %v29
    %v71 = vunpack.c.l.b16 %v30
    %v72 = vunpack.c.l.b16 %v31
    %v73 = vpack.c.b16 %v58, %v57
    %v74 = vpack.c.b16 %v60, %v59
    %v75 = vpack.c.b16 %v62, %v61
    %v76 = vpack.c.b16 %v64, %v63
    %v77 = vpack.c.b16 %v66, %v65
    %v78 = vpack.c.b16 %v68, %v67
    %v79 = vpack.c.b16 %v70, %v69
    %v80 = vpack.c.b16 %v72, %v71
    %v83 = vunpack.c.l.b16 %v32
    %v84 = vunpack.c.l.b16 %v33
    %v85 = vpack.c.b16 %v84, %v83
    %vm86 = vcmask 97280
    %v88 = vsel %vm86, %v73, 0
    %v91 = vsel %vm86, %v74, 0
    %v94 = vsel %vm86, %v75, 0
    %v97 = vsel %vm86, %v76, 0
    %v100 = vsel %vm86, %v77, 0
    %v103 = vsel %vm86, %v78, 0
    %v106 = vsel %vm86, %v79, 0
    %v109 = vsel %vm86, %v80, 0
    %vm111 = vcmask 1045504
    %v113 = vsel %vm111, %v85, 0
    %115 = vmatprep.subr.bf16.mxu0 0
    %116 = vmatpush1.bf16.msra.mxu0 0
    %117 = vmatprep.subr.bf16.mxu0 0
    %118 = vmatpush1.bf16.msra.mxu0 0
    %119 = vmatprep.subr.bf16.mxu0 0
    %120 = vmatpush1.bf16.msra.mxu0 0
    %121 = vmatprep.subr.bf16.mxu0 0
    %122 = vmatpush1.bf16.msra.mxu0 0
    %123 = vmatprep.subr.bf16.mxu0 0
    %124 = vmatpush1.bf16.msra.mxu0 0
    %125 = vmatprep.subr.bf16.mxu0 0
    %126 = vmatpush1.bf16.msra.mxu0 0
    %127 = vmatprep.subr.bf16.mxu0 0
    %128 = vmatpush1.bf16.msra.mxu0 0
    %129 = vmatprep.subr.bf16.mxu0 0
    %130 = vmatpush1.bf16.msra.mxu0 %v113
    %131 = vmatprep.subr.bf16.mxu0 0
    %132 = vmatpush2.bf16.msra.mxu0 0
    %133 = vmatprep.subr.bf16.mxu0 0
    %134 = vmatpush2.bf16.msra.mxu0 0
    %135 = vmatprep.subr.bf16.mxu0 0
    %136 = vmatpush2.bf16.msra.mxu0 0
    %137 = vmatprep.subr.bf16.mxu0 0
    %138 = vmatpush2.bf16.msra.mxu0 0
    %139 = vmatprep.subr.bf16.mxu0 0
    %140 = vmatpush2.bf16.msra.mxu0 0
    %141 = vmatprep.subr.bf16.mxu0 0
    %142 = vmatpush2.bf16.msra.mxu0 0
    %143 = vmatprep.subr.bf16.mxu0 0
    %144 = vmatpush2.bf16.msra.mxu0 0
    %145 = vmatprep.subr.bf16.mxu0 0
    %146 = vmatpush2.bf16.msra.mxu0 0
    %147 = vmatprep.mubr.bf16.mxu0 0
    %148 = vmatmul.mubr.bf16.gmra.mxu0 %v88
    %v149 = vpop.f32.mrf.mxu0
    %v150 = vadd.f32 %v39, %v149
    %v151 = vpop.f32.mrf.mxu0
    %v152 = vpop.f32.mrf.mxu0
    %v153 = vadd.f32 %v39, %v152
    %v154 = vpop.f32.mrf.mxu0
    %155 = vmatprep.mubr.bf16.mxu0 0
    %156 = vmatmul.mubr.bf16.gmra.mxu0 %v91
    %v157 = vpop.f32.mrf.mxu0
    %v158 = vadd.f32 %v39, %v157
    %v159 = vpop.f32.mrf.mxu0
    %v160 = vpop.f32.mrf.mxu0
    %v161 = vadd.f32 %v39, %v160
    %v162 = vpop.f32.mrf.mxu0
    %163 = vmatprep.mubr.bf16.mxu0 0
    %164 = vmatmul.mubr.bf16.gmra.mxu0 %v94
    %v165 = vpop.f32.mrf.mxu0
    %v166 = vadd.f32 %v39, %v165
    %v167 = vpop.f32.mrf.mxu0
    %v168 = vpop.f32.mrf.mxu0
    %v169 = vadd.f32 %v39, %v168
    %v170 = vpop.f32.mrf.mxu0
    %171 = vmatprep.mubr.bf16.mxu0 0
    %172 = vmatmul.mubr.bf16.gmra.mxu0 %v97
    %v173 = vpop.f32.mrf.mxu0
    %v174 = vadd.f32 %v39, %v173
    %v175 = vpop.f32.mrf.mxu0
    %v176 = vpop.f32.mrf.mxu0
    %v177 = vadd.f32 %v39, %v176
    %v178 = vpop.f32.mrf.mxu0
    %179 = vmatprep.mubr.bf16.mxu0 0
    %180 = vmatmul.mubr.bf16.gmra.mxu0 %v100
    %v181 = vpop.f32.mrf.mxu0
    %v182 = vadd.f32 %v39, %v181
    %v183 = vpop.f32.mrf.mxu0
    %v184 = vpop.f32.mrf.mxu0
    %v185 = vadd.f32 %v39, %v184
    %v186 = vpop.f32.mrf.mxu0
    %187 = vmatprep.mubr.bf16.mxu0 0
    %188 = vmatmul.mubr.bf16.gmra.mxu0 %v103
    %v189 = vpop.f32.mrf.mxu0
    %v190 = vadd.f32 %v39, %v189
    %v191 = vpop.f32.mrf.mxu0
    %v192 = vpop.f32.mrf.mxu0
    %v193 = vadd.f32 %v39, %v192
    %v194 = vpop.f32.mrf.mxu0
    %195 = vmatprep.mubr.bf16.mxu0 0
    %196 = vmatmul.mubr.bf16.gmra.mxu0 %v106
    %v197 = vpop.f32.mrf.mxu0
    %v198 = vadd.f32 %v39, %v197
    %v199 = vpop.f32.mrf.mxu0
    %v200 = vpop.f32.mrf.mxu0
    %v201 = vadd.f32 %v39, %v200
    %v202 = vpop.f32.mrf.mxu0
    %203 = vmatprep.mubr.bf16.mxu0 0
    %204 = vmatmul.mubr.bf16.gmra.mxu0 %v109
    %v205 = vpop.f32.mrf.mxu0
    %v206 = vadd.f32 %v39, %v205
    %v207 = vpop.f32.mrf.mxu0
    %v208 = vpop.f32.mrf.mxu0
    %v209 = vadd.f32 %v39, %v208
    %v210 = vpop.f32.mrf.mxu0
    %211 = vdwg.mxu0
    %vm212 = vcmp.gt.f32.partialorder %v150, 0.0
    %vm213 = vcmp.gt.f32.partialorder %v153, 0.0
    %vm214 = vcmp.gt.f32.partialorder %v158, 0.0
    %vm215 = vcmp.gt.f32.partialorder %v161, 0.0
    %vm216 = vcmp.gt.f32.partialorder %v166, 0.0
    %vm217 = vcmp.gt.f32.partialorder %v169, 0.0
    %vm218 = vcmp.gt.f32.partialorder %v174, 0.0
    %vm219 = vcmp.gt.f32.partialorder %v177, 0.0
    %vm220 = vcmp.gt.f32.partialorder %v182, 0.0
    %vm221 = vcmp.gt.f32.partialorder %v185, 0.0
    %vm222 = vcmp.gt.f32.partialorder %v190, 0.0
    %vm223 = vcmp.gt.f32.partialorder %v193, 0.0
    %vm224 = vcmp.gt.f32.partialorder %v198, 0.0
    %vm225 = vcmp.gt.f32.partialorder %v201, 0.0
    %vm226 = vcmp.gt.f32.partialorder %v206, 0.0
    %vm227 = vcmp.gt.f32.partialorder %v209, 0.0
    %v228 = vmul.f32 %v150, 1.442695
    %v229 = vpow.pop %v228
    %v230 = vmul.f32 %v153, 1.442695
    %v231 = vpow.pop %v230
    %v232 = vmul.f32 %v158, 1.442695
    %v233 = vpow.pop %v232
    %v234 = vmul.f32 %v161, 1.442695
    %v235 = vpow.pop %v234
    %v236 = vmul.f32 %v166, 1.442695
    %v237 = vpow.pop %v236
    %v238 = vmul.f32 %v169, 1.442695
    %v239 = vpow.pop %v238
    %v240 = vmul.f32 %v174, 1.442695
    %v241 = vpow.pop %v240
    %v242 = vmul.f32 %v177, 1.442695
    %v243 = vpow.pop %v242
    %v244 = vmul.f32 %v182, 1.442695
    %v245 = vpow.pop %v244
    %v246 = vmul.f32 %v185, 1.442695
    %v247 = vpow.pop %v246
    %v248 = vmul.f32 %v190, 1.442695
    %v249 = vpow.pop %v248
    %v250 = vmul.f32 %v193, 1.442695
    %v251 = vpow.pop %v250
    %v252 = vmul.f32 %v198, 1.442695
    %v253 = vpow.pop %v252
    %v254 = vmul.f32 %v201, 1.442695
    %v255 = vpow.pop %v254
    %v256 = vmul.f32 %v206, 1.442695
    %v257 = vpow.pop %v256
    %v258 = vmul.f32 %v209, 1.442695
    %v259 = vpow.pop %v258
    %v260 = vsub.f32 %v229, 1.0
    %v261 = vsub.f32 %v231, 1.0
    %v262 = vsub.f32 %v233, 1.0
    %v263 = vsub.f32 %v235, 1.0
    %v264 = vsub.f32 %v237, 1.0
    %v265 = vsub.f32 %v239, 1.0
    %v266 = vsub.f32 %v241, 1.0
    %v267 = vsub.f32 %v243, 1.0
    %v268 = vsub.f32 %v245, 1.0
    %v269 = vsub.f32 %v247, 1.0
    %v270 = vsub.f32 %v249, 1.0
    %v271 = vsub.f32 %v251, 1.0
    %v272 = vsub.f32 %v253, 1.0
    %v273 = vsub.f32 %v255, 1.0
    %v274 = vsub.f32 %v257, 1.0
    %v275 = vsub.f32 %v259, 1.0
    %v276 = vsel %vm212, %v150, %v260
    %v277 = vsel %vm213, %v153, %v261
    %v278 = vsel %vm214, %v158, %v262
    %v279 = vsel %vm215, %v161, %v263
    %v280 = vsel %vm216, %v166, %v264
    %v281 = vsel %vm217, %v169, %v265
    %v282 = vsel %vm218, %v174, %v266
    %v283 = vsel %vm219, %v177, %v267
    %v284 = vsel %vm220, %v182, %v268
    %v285 = vsel %vm221, %v185, %v269
    %v286 = vsel %vm222, %v190, %v270
    %v287 = vsel %vm223, %v193, %v271
    %v288 = vsel %vm224, %v198, %v272
    %v289 = vsel %vm225, %v201, %v273
    %v290 = vsel %vm226, %v206, %v274
    %v291 = vsel %vm227, %v209, %v275
    %v292 = vpack.c.bf16 %v277, %v276
    %v293 = vpack.c.bf16 %v279, %v278
    %v294 = vpack.c.bf16 %v281, %v280
    %v295 = vpack.c.bf16 %v283, %v282
    %v296 = vpack.c.bf16 %v285, %v284
    %v297 = vpack.c.bf16 %v287, %v286
    %v298 = vpack.c.bf16 %v289, %v288
    %v299 = vpack.c.bf16 %v291, %v290
    %v308 = vunpack.c.l.b16 %v292
    %v309 = vunpack.c.h.b16 %v292
    %v310 = vunpack.c.l.b16 %v293
    %v311 = vunpack.c.h.b16 %v293
    %v312 = vunpack.c.l.b16 %v294
    %v313 = vunpack.c.h.b16 %v294
    %v314 = vunpack.c.l.b16 %v295
    %v315 = vunpack.c.h.b16 %v295
    %v316 = vunpack.c.l.b16 %v296
    %v317 = vunpack.c.h.b16 %v296
    %v318 = vunpack.c.l.b16 %v297
    %v319 = vunpack.c.h.b16 %v297
    %v320 = vunpack.c.l.b16 %v298
    %v321 = vunpack.c.h.b16 %v298
    %v322 = vunpack.c.l.b16 %v299
    %v323 = vunpack.c.h.b16 %v299
    %v324 = vpack.c.b16 %v308, %v308
    %v325 = vpack.c.b16 %v309, %v309
    %v326 = vpack.c.b16 %v310, %v310
    %v327 = vpack.c.b16 %v311, %v311
    %v328 = vpack.c.b16 %v312, %v312
    %v329 = vpack.c.b16 %v313, %v313
    %v330 = vpack.c.b16 %v314, %v314
    %v331 = vpack.c.b16 %v315, %v315
    %v332 = vpack.c.b16 %v316, %v316
    %v333 = vpack.c.b16 %v317, %v317
    %v334 = vpack.c.b16 %v318, %v318
    %v335 = vpack.c.b16 %v319, %v319
    %v336 = vpack.c.b16 %v320, %v320
    %v337 = vpack.c.b16 %v321, %v321
    %v338 = vpack.c.b16 %v322, %v322
    %v339 = vpack.c.b16 %v323, %v323
    %356 = vst [vmem:[#allocation2] sm:$0xf] %v324
    %357 = vst [vmem:[#allocation2 + $0x4] sm:$0xf] %v325
    %358 = vst [vmem:[#allocation2 + $0x8] sm:$0xf] %v326
    %359 = vst [vmem:[#allocation2 + $0xc] sm:$0xf] %v327
    %360 = vst [vmem:[#allocation2 + $0x10] sm:$0xf] %v328
    %361 = vst [vmem:[#allocation2 + $0x14] sm:$0xf] %v329
    %362 = vst [vmem:[#allocation2 + $0x18] sm:$0xf] %v330
    %363 = vst [vmem:[#allocation2 + $0x1c] sm:$0xf] %v331
    %364 = vst [vmem:[#allocation2 + $0x20] sm:$0xf] %v332
    %365 = vst [vmem:[#allocation2 + $0x24] sm:$0xf] %v333
    %366 = vst [vmem:[#allocation2 + $0x28] sm:$0xf] %v334
    %367 = vst [vmem:[#allocation2 + $0x2c] sm:$0xf] %v335
    %368 = vst [vmem:[#allocation2 + $0x30] sm:$0xf] %v336
    %369 = vst [vmem:[#allocation2 + $0x34] sm:$0xf] %v337
    %370 = vst [vmem:[#allocation2 + $0x38] sm:$0xf] %v338
    %371 = vst [vmem:[#allocation2 + $0x3c] sm:$0xf] %v339
    // Predicated region
    $region14: #{tpu_custom_call.1} parent=1 // pred_check
      _
    $region15: #{tpu_custom_call.1} parent=1 // pred_check_branch
      %373 = sbr.rel (0) target = $region17
    $region16: #{tpu_custom_call.1} parent=1 // pred_region
      %s375 = ssub.s32 1024, 1024
      %376 = vsyncadd [#allocation3], %s375
      %s377 = sshll.u32 [#allocation2], 4
      %s378 = int_to_ptr.vmem [resolvable:$true] %s377
      %383 = dma.vmem_to_hbm [thread:$0]  %s378, 1024, %s3, [#allocation3], 64, 64, 4
    $region17: #{tpu_custom_call.1} parent=1 // pred_fallthru
      _
    // Predicated region
    $region18: #{tpu_custom_call.1} parent=1 // pred_check
      _
    $region19: #{tpu_custom_call.1} parent=1 // pred_check_branch
      %385 = sbr.rel (0) target = $region21
    $region20: #{tpu_custom_call.1} parent=1 // pred_region
      %386 = dma.done [#allocation3], 1024
    $region21: #{tpu_custom_call.1} parent=1 // pred_fallthru
      _
    %387 = vsyncpa [#allocation3], 1

</llo_original>
